<compile_context>
chip_gen: v7x
topology: tpu7x:2x2x1
jax: 0.10.0
libtpu: 0.0.40
codegen_flags: <defaults>
</compile_context>

<pallas_src>
import jax
import jax.numpy as jnp
from jax import lax
from jax.experimental import pallas as pl
from jax.experimental.pallas import tpu as pltpu

# TODO(synk): the original ModifiedModel wraps an arbitrary `model` and calls an
# externally-defined actual_portfolio_selection(); here the base model is a fixed
# deterministic MLP (Linear -> ReLU -> Linear) and the selection is softmax over assets.

B = 2          # batch
N_ASSETS = 8   # number of assets (softmax axis)
D_IN = 32      # per-asset feature dim
HIDDEN = 32    # hidden dim of synthetic base model


def _portfolio_kernel(x_ref, w1_ref, bw_ref, out_ref):
    # x_ref : (B*N, D) VMEM     w1_ref: (H, D) VMEM
    # bw_ref: (2, H)   VMEM     row 0 = b1, row 1 = w2   (consolidated operand)
    # out_ref: (B, N, 1) VMEM
    x = x_ref[...]                                                    # (B*N, D) f32

    # base model, layer 1: hidden = relu(x @ W1^T + b1)
    # bf16 operands hit the native MXU path on v5e/v6e/v7x; accumulation stays f32.
    h = lax.dot_general(x.astype(jnp.bfloat16),
                        w1_ref[...].astype(jnp.bfloat16),
                        (((1,), (1,)), ((), ())),
                        preferred_element_type=jnp.float32)           # (B*N, H) f32
    h = jnp.maximum(h + bw_ref[0:1, :], 0.0)

    # base model, layer 2: scores = h @ w2^T.  The (B*N,32)x(32,1) product is
    # degenerate for the MXU, so run it as a VPU broadcast-mul + XLU lane reduce.
    # (b2 is omitted: softmax over the asset axis is shift-invariant, so the
    #  scalar bias cannot change the output.)
    s = jnp.sum(h * bw_ref[1:2, :], axis=-1, keepdims=True)           # (B*N, 1)

    # actual_portfolio_selection: softmax over the asset axis.
    # (B*N, 1) -> (B, N, 1) is a pure sublane split; the reduction runs on sublanes.
    b, n, _ = out_ref.shape
    s = s.reshape(b, n, 1)
    m = jnp.max(s, axis=1, keepdims=True)                             # (B, 1, 1)
    e = jnp.exp(s - m)
    denom = jnp.sum(e, axis=1, keepdims=True)                         # (B, 1, 1)
    # exact divide (not the approx EUP reciprocal) so weights sum to 1 exactly
    out_ref[...] = (e / denom).astype(out_ref.dtype)


def modified_model_forward(x_bnd, w1, b1, w2, b2=None):
    """x_bnd: [B, N_ASSETS, D_IN] (PyTorch layout).  Returns [B, N_ASSETS] weights.

    b2 is accepted for interface parity but not used inside the kernel: adding a
    single scalar to every score is a no-op under the asset-axis softmax.
    """
    b, n, d = x_bnd.shape
    x2 = x_bnd.reshape(b * n, d)              # contiguous reshape: no data movement
    bw = jnp.concatenate([b1, w2], axis=0)    # (2, H): one VMEM slab instead of two DMAs

    out = pl.pallas_call(
        _portfolio_kernel,
        out_shape=jax.ShapeDtypeStruct((b, n, 1), jnp.float32),
        in_specs=[
            pl.BlockSpec(memory_space=pltpu.MemorySpace.VMEM),   # x   (B*N, D)
            pl.BlockSpec(memory_space=pltpu.MemorySpace.VMEM),   # W1  (H, D)
            pl.BlockSpec(memory_space=pltpu.MemorySpace.VMEM),   # bw  (2, H) = [b1; w2]
        ],
        out_specs=pl.BlockSpec(memory_space=pltpu.MemorySpace.VMEM),
    )(x2, w1, bw)
    return out.reshape(b, n)


def _make_params():
    # deterministic synthetic base-model parameters
    k = jax.random.PRNGKey(0)
    k1, k2, k3, k4 = jax.random.split(k, 4)
    w1 = jax.random.normal(k1, (HIDDEN, D_IN), jnp.float32) * 0.1
    b1 = jax.random.normal(k2, (1, HIDDEN), jnp.float32) * 0.01
    w2 = jax.random.normal(k3, (1, HIDDEN), jnp.float32) * 0.1
    b2 = jax.random.normal(k4, (1, 1), jnp.float32) * 0.01
    return w1, b1, w2, b2


def _reference(x_bnd, w1, b1, w2, b2):
    # pure-JAX f32 reference of the same forward pass (per-asset MLP scorer + softmax);
    # includes the b2 add, which the kernel legitimately elides (softmax shift-invariance).
    h = jnp.maximum(jnp.einsum("bnd,hd->bnh", x_bnd, w1) + b1[None], 0.0)
    s = jnp.einsum("bnh,oh->bno", h, w2) + b2[None]       # (B, N, 1)
    s = s[..., 0]                                         # (B, N)
    return jax.nn.softmax(s, axis=-1)


if __name__ == "__main__":
    key = jax.random.PRNGKey(0)
    x = jax.random.normal(key, (B, N_ASSETS, D_IN), jnp.float32)
    w1, b1, w2, b2 = _make_params()

    out = modified_model_forward(x, w1, b1, w2, b2)
    out = jax.block_until_ready(out)

    ref = _reference(x, w1, b1, w2, b2)
    assert out.shape == (B, N_ASSETS)
    # 2e-3 tolerance vs the f32 reference: the layer-1 matmul uses bf16 operands
    # (f32 accumulation); softmax damps the resulting ~1e-3 score perturbation.
    assert jnp.allclose(out, ref, atol=2e-3, rtol=2e-3)
    # portfolio weights must sum to 1 per batch element (exact divide -> f32 roundoff only)
    assert jnp.allclose(jnp.sum(out, axis=-1), jnp.ones((B,)), atol=1e-5)

    print("KERNEL_OK")
</pallas_src>

<mosaic_0001>
module attributes {stable_mosaic.version = 11 : i64} {
  func.func @_portfolio_kernel(%arg0: memref<16x32xf32, #tpu.memory_space<vmem>>, %arg1: memref<32x32xf32, #tpu.memory_space<vmem>>, %arg2: memref<2x32xf32, #tpu.memory_space<vmem>>, %arg3: memref<2x8x1xf32, #tpu.memory_space<vmem>>) attributes {dimension_semantics = [], scalar_prefetch = 0 : i64, scratch_operands = 0 : i64, tpu.core_type = #tpu.core_type<tc>} {
    %c0 = arith.constant 0 : index
    %c0_0 = arith.constant 0 : index
    %0 = vector.load %arg0[%c0, %c0_0] : memref<16x32xf32, #tpu.memory_space<vmem>>, vector<16x32xf32>
    %1 = arith.truncf %0 : vector<16x32xf32> to vector<16x32xbf16>
    %c0_1 = arith.constant 0 : index
    %c0_2 = arith.constant 0 : index
    %2 = vector.load %arg1[%c0_1, %c0_2] : memref<32x32xf32, #tpu.memory_space<vmem>>, vector<32x32xf32>
    %3 = arith.truncf %2 : vector<32x32xf32> to vector<32x32xbf16>
    %cst = arith.constant dense<0.000000e+00> : vector<16x32xf32>
    %4 = tpu.matmul %1, %3, %cst {dimension_numbers = #tpu.dot_dimension_numbers<[1], [1], [0], [0], [0, 0, 1, 0], [], []>} : vector<16x32xbf16>, vector<32x32xbf16>, vector<16x32xf32> -> vector<16x32xf32>
    %c0_3 = arith.constant 0 : index
    %c0_4 = arith.constant 0 : index
    %5 = vector.load %arg2[%c0_3, %c0_4] : memref<2x32xf32, #tpu.memory_space<vmem>>, vector<1x32xf32>
    %6 = vector.broadcast %5 : vector<1x32xf32> to vector<16x32xf32>
    %7 = arith.addf %4, %6 : vector<16x32xf32>
    %cst_5 = arith.constant 0.000000e+00 : f32
    %8 = vector.broadcast %cst_5 : f32 to vector<16x32xf32>
    %9 = arith.maximumf %7, %8 : vector<16x32xf32>
    %c1 = arith.constant 1 : index
    %c0_6 = arith.constant 0 : index
    %10 = vector.load %arg2[%c1, %c0_6] : memref<2x32xf32, #tpu.memory_space<vmem>>, vector<1x32xf32>
    %11 = vector.broadcast %10 : vector<1x32xf32> to vector<16x32xf32>
    %12 = arith.mulf %9, %11 : vector<16x32xf32>
    %cst_7 = arith.constant dense<0.000000e+00> : vector<16xf32>
    %13 = vector.multi_reduction <add>, %12, %cst_7 [1] : vector<16x32xf32> to vector<16xf32>
    %14 = vector.shape_cast %13 : vector<16xf32> to vector<16x1xf32>
    %15 = vector.shape_cast %14 : vector<16x1xf32> to vector<2x8x1xf32>
    %cst_8 = arith.constant dense<0xFF800000> : vector<2x1xf32>
    %16 = vector.multi_reduction <maximumf>, %15, %cst_8 [1] : vector<2x8x1xf32> to vector<2x1xf32>
    %17 = vector.shape_cast %16 : vector<2x1xf32> to vector<2x1x1xf32>
    %18 = vector.broadcast %17 : vector<2x1x1xf32> to vector<2x8x1xf32>
    %19 = arith.subf %15, %18 : vector<2x8x1xf32>
    %20 = math.exp %19 : vector<2x8x1xf32>
    %cst_9 = arith.constant dense<0.000000e+00> : vector<2x1xf32>
    %21 = vector.multi_reduction <add>, %20, %cst_9 [1] : vector<2x8x1xf32> to vector<2x1xf32>
    %22 = vector.shape_cast %21 : vector<2x1xf32> to vector<2x1x1xf32>
    %23 = vector.broadcast %22 : vector<2x1x1xf32> to vector<2x8x1xf32>
    %24 = arith.divf %20, %23 : vector<2x8x1xf32>
    %c0_10 = arith.constant 0 : index
    %c0_11 = arith.constant 0 : index
    %c0_12 = arith.constant 0 : index
    %25 = vector.load %arg3[%c0_10, %c0_11, %c0_12] : memref<2x8x1xf32, #tpu.memory_space<vmem>>, vector<2x8x1xf32>
    tpu.vector_store %arg3[%c0_10, %c0_11, %c0_12], %24 {strides = array<i32>} : memref<2x8x1xf32, #tpu.memory_space<vmem>>, vector<2x8x1xf32>,
    return
  }
}

</mosaic_0001>

<llo_original>
// kernel: tpu_custom_call.1
$region0: #{tpu_custom_call.1}
  #allocation0 [shape = 'u32[]', space=smem, size = 0x4, offset = 0x4, fixed_abs, tag = 'smem constant byte address 0x4 - core index']
  #allocation1 [shape = 'u32[144,128]{1,0:T(1,128)}', space=vmem, size = 0x12000, scoped, tag = 'internal scratch']
  %s0 = inlined_call_operand.hbm [shape: f32[16,32], index: 0, kind: input, shape index: {}]
  %s1 = inlined_call_operand.hbm [shape: f32[32,32], index: 1, kind: input, shape index: {}]
  %s2 = inlined_call_operand.vmem [shape: f32[2,32], index: 2, kind: input, shape index: {}]
  %s3 = inlined_call_operand.vmem [shape: f32[2,8,1], index: 3, kind: output, shape index: {}]
  %s4 = sld [smem:[#allocation0]]
  $region30: #{tpu_custom_call.1} parent=0
    _
  %s6 = ssub.s32 1, %s4
  %s7 = scalar_select 0, %s6, %s4
  $region1: #{tpu_custom_call.1} parent=0
    #allocation2 [shape = 'u8[8192]{0}', space=vmem, size = 0x2000, scoped, tag = 'input window, operand 0, single buffered']
    #allocation3 [shape = 's32[1]{0}', space=sflag, size = 0x4, scoped, tag = 'scoped memory for tpu_custom_call.1']
    #allocation4 [shape = 'u8[16384]{0}', space=vmem, size = 0x4000, scoped, tag = 'input window, operand 1, single buffered']
    #allocation5 [shape = 's32[1]{0}', space=sflag, size = 0x4, scoped, tag = 'scoped memory for tpu_custom_call.1']
    %8 = vsyncpa [#allocation3], 0
    %9 = vsyncpa [#allocation5], 0
    // Predicated region
    $region2: #{tpu_custom_call.1} parent=1 // pred_check
      _
    $region3: #{tpu_custom_call.1} parent=1 // pred_check_branch
      %11 = sbr.rel (0) target = $region5
    $region4: #{tpu_custom_call.1} parent=1 // pred_region
      %s13 = ssub.s32 256, 256
      %14 = vsyncadd [#allocation3], %s13
      %s15 = sshll.u32 [#allocation2], 4
      %s16 = int_to_ptr.vmem [resolvable:$true] %s15
      %21 = dma.hbm_to_vmem [thread:$0]  %s0, 256, %s16, [#allocation3], 128, 128, 8
    $region5: #{tpu_custom_call.1} parent=1 // pred_fallthru
      _
    // Predicated region
    $region6: #{tpu_custom_call.1} parent=1 // pred_check
      _
    $region7: #{tpu_custom_call.1} parent=1 // pred_check_branch
      %23 = sbr.rel (0) target = $region9
    $region8: #{tpu_custom_call.1} parent=1 // pred_region
      %s25 = ssub.s32 512, 512
      %26 = vsyncadd [#allocation5], %s25
      %s27 = sshll.u32 [#allocation4], 4
      %s28 = int_to_ptr.vmem [resolvable:$true] %s27
      %33 = dma.hbm_to_vmem [thread:$0]  %s1, 512, %s28, [#allocation5], 128, 128, 8
    $region9: #{tpu_custom_call.1} parent=1 // pred_fallthru
      _
    // Predicated region
    $region10: #{tpu_custom_call.1} parent=1 // pred_check
      _
    $region11: #{tpu_custom_call.1} parent=1 // pred_check_branch
      %35 = sbr.rel (0) target = $region13
    $region12: #{tpu_custom_call.1} parent=1 // pred_region
      _
    $region13: #{tpu_custom_call.1} parent=1 // pred_fallthru
      _
    // Predicated region
    $region14: #{tpu_custom_call.1} parent=1 // pred_check
      _
    $region15: #{tpu_custom_call.1} parent=1 // pred_check_branch
      %37 = sbr.rel (0) target = $region17
    $region16: #{tpu_custom_call.1} parent=1 // pred_region
      %38 = dma.done [#allocation3], 256
    $region17: #{tpu_custom_call.1} parent=1 // pred_fallthru
      _
    // Predicated region
    $region18: #{tpu_custom_call.1} parent=1 // pred_check
      _
    $region19: #{tpu_custom_call.1} parent=1 // pred_check_branch
      %40 = sbr.rel (0) target = $region21
    $region20: #{tpu_custom_call.1} parent=1 // pred_region
      %41 = dma.done [#allocation5], 512
    $region21: #{tpu_custom_call.1} parent=1 // pred_fallthru
      _
    %v43 = vld [vmem:[#allocation2] sm:$0xff]
    %v44 = vld [vmem:[#allocation2 + $0x8] sm:$0xff]
    %v45 = vpack.c.bf16 %v44, %v43
    %v46 = vld [vmem:[#allocation4] sm:$0xff]
    %v47 = vld [vmem:[#allocation4 + $0x8] sm:$0xff]
    %v48 = vld [vmem:[#allocation4 + $0x10] sm:$0xff]
    %v49 = vld [vmem:[#allocation4 + $0x18] sm:$0xff]
    %v50 = vpack.c.bf16 %v47, %v46
    %v51 = vpack.c.bf16 %v49, %v48
    %v52 = vld [vmem:[%s2] sm:$0x1]
    %v53 = vlaneseq
    %v54 = vshrl.u32 %v53, 7
    %v55 = vsub.s32 0, %v54
    %v56 = vrot.slane %v52, %v55
    %vm57 = vcmask 261120
    %v59 = vsel %vm57, %v45, 0
    %v62 = vsel %vm57, %v50, 0
    %v65 = vsel %vm57, %v51, 0
    %67 = vmatprep.subr.bf16.mxu0 0
    %68 = vmatpush1.bf16.xpose.msra.mxu0 %v62
    %69 = vmatprep.subr.bf16.mxu0 0
    %70 = vmatpush1.bf16.xpose.msra.mxu0 %v65
    %71 = vmatprep.subr.bf16.mxu0 0
    %72 = vmatpush1.bf16.xpose.msra.mxu0 0
    %73 = vmatprep.subr.bf16.mxu0 0
    %74 = vmatpush1.bf16.xpose.msra.mxu0 0
    %75 = vmatprep.subr.bf16.mxu0 0
    %76 = vmatpush1.bf16.xpose.msra.mxu0 0
    %77 = vmatprep.subr.bf16.mxu0 0
    %78 = vmatpush1.bf16.xpose.msra.mxu0 0
    %79 = vmatprep.subr.bf16.mxu0 0
    %80 = vmatpush1.bf16.xpose.msra.mxu0 0
    %81 = vmatprep.subr.bf16.mxu0 0
    %82 = vmatpush1.bf16.xpose.msra.mxu0 0
    %83 = vmatprep.subr.bf16.mxu0 0
    %84 = vmatpush1.bf16.xpose.msra.mxu0 0
    %85 = vmatprep.subr.bf16.mxu0 0
    %86 = vmatpush1.bf16.xpose.msra.mxu0 0
    %87 = vmatprep.subr.bf16.mxu0 0
    %88 = vmatpush1.bf16.xpose.msra.mxu0 0
    %89 = vmatprep.subr.bf16.mxu0 0
    %90 = vmatpush1.bf16.xpose.msra.mxu0 0
    %91 = vmatprep.subr.bf16.mxu0 0
    %92 = vmatpush1.bf16.xpose.msra.mxu0 0
    %93 = vmatprep.subr.bf16.mxu0 0
    %94 = vmatpush1.bf16.xpose.msra.mxu0 0
    %95 = vmatprep.subr.bf16.mxu0 0
    %96 = vmatpush1.bf16.xpose.msra.mxu0 0
    %97 = vmatprep.subr.bf16.mxu0 0
    %98 = vmatpush1.bf16.xpose.msra.mxu0 0
    %99 = vmatprep.mubr.bf16.mxu0 0
    %100 = vmatmul.mubr.bf16.gmra.mrb[0].mxu0 %v59
    %v101 = vpop.f32.mrb[0].mxu0
    %v102 = vadd.f32 %v56, %v101
    %v103 = vpop.f32.mrb[0].mxu0
    %v104 = vpop.f32.mrb[0].mxu0
    %v105 = vadd.f32 %v56, %v104
    %v106 = vpop.f32.mrb[0].mxu0
    %107 = vdwg.mxu0
    %v108 = vmax.f32 %v102, 0.0
    %v109 = vmax.f32 %v105, 0.0
    %v110 = vld [vmem:[%s2 + $0x1] sm:$0x1]
    %v111 = vlaneseq
    %v112 = vshrl.u32 %v111, 7
    %v113 = vsub.s32 0, %v112
    %v114 = vrot.slane %v110, %v113
    %v115 = vmul.f32 %v108, %v114
    %v116 = vmul.f32 %v109, %v114
    %v117 = vsel %vm57, %v115, 0.0
    %118 = vadd.xlane.f32.xlu0 %v117
    %v119 = vpop.xlane.xlu0 %118
    %v120 = vsel %vm57, %v116, 0.0
    %121 = vadd.xlane.f32.xlu0 %v120
    %v122 = vpop.xlane.xlu0 %121
    %v123 = vrot.slane %v119, 4
    %v124 = vmax.f32 %v119, %v123
    %v125 = vrot.slane %v124, 2
    %v126 = vmax.f32 %v124, %v125
    %v127 = vrot.slane %v126, 1
    %v128 = vmax.f32 %v126, %v127
    %v129 = vrot.slane %v122, 4
    %v130 = vmax.f32 %v122, %v129
    %v131 = vrot.slane %v130, 2
    %v132 = vmax.f32 %v130, %v131
    %v133 = vrot.slane %v132, 1
    %v134 = vmax.f32 %v132, %v133
    %v135 = vsub.f32 %v119, %v128
    %v136 = vsub.f32 %v122, %v134
    %v137 = vmul.f32 %v135, 1.442695
    %v138 = vpow.pop %v137
    %v139 = vmul.f32 %v136, 1.442695
    %v140 = vpow.pop %v139
    %v141 = vrot.slane %v138, 4
    %v142 = vadd.f32 %v138, %v141
    %v143 = vrot.slane %v142, 2
    %v144 = vadd.f32 %v142, %v143
    %v145 = vrot.slane %v144, 1
    %v146 = vadd.f32 %v144, %v145
    %v147 = vrot.slane %v140, 4
    %v148 = vadd.f32 %v140, %v147
    %v149 = vrot.slane %v148, 2
    %v150 = vadd.f32 %v148, %v149
    %v151 = vrot.slane %v150, 1
    %v152 = vadd.f32 %v150, %v151
    %v153 = vrcp.pop %v146
    %v154 = vmul.f32 %v138, %v153
    %v155 = vrcp.pop %v152
    %v156 = vmul.f32 %v140, %v155
    %vm157 = vcmask 7168
    %158 = vst.msk [vmem:[%s3] sm:$0xff] %vm157, %v154
    %159 = vst.msk [vmem:[%s3 + $0x8] sm:$0xff] %vm157, %v156
    // Predicated region
    $region22: #{tpu_custom_call.1} parent=1 // pred_check
      _
    $region23: #{tpu_custom_call.1} parent=1 // pred_check_branch
      %161 = sbr.rel (0) target = $region25
    $region24: #{tpu_custom_call.1} parent=1 // pred_region
      _
    $region25: #{tpu_custom_call.1} parent=1 // pred_fallthru
      _
    // Predicated region
    $region26: #{tpu_custom_call.1} parent=1 // pred_check
      _
    $region27: #{tpu_custom_call.1} parent=1 // pred_check_branch
      %163 = sbr.rel (0) target = $region29
    $region28: #{tpu_custom_call.1} parent=1 // pred_region
      _
    $region29: #{tpu_custom_call.1} parent=1 // pred_fallthru
      _
    %164 = vsyncpa [#allocation3], 1
    %165 = vsyncpa [#allocation5], 1

</llo_original>
